<compile_context>
chip_gen: v7x
topology: tpu7x:2x2x1
jax: 0.10.0
libtpu: 0.0.40
codegen_flags: <defaults>
</compile_context>

<pallas_src>
import math

import jax
import jax.numpy as jnp
from jax.experimental import pallas as pl
from jax.experimental.pallas import tpu as pltpu


def _copy_kernel(x_ref, o_ref):
    # Pure copy of the current lane-dense block (full-width unmasked vst).
    o_ref[...] = x_ref[...]


def _sublane_multiple(dtype) -> int:
    """Native sublane packing: 8 rows for 32-bit, 16 for 16-bit, 32 for 8-bit."""
    itemsize = jnp.dtype(dtype).itemsize
    return max(8, 8 * (4 // max(1, itemsize)))


def _pick_lanes(n: int) -> int:
    """Widest lane-dense last dim that divides n exactly (fallback 128)."""
    for lanes in (1024, 512, 256, 128):
        if n % lanes == 0:
            return lanes
    return 128


def _block_budget():
    """(per-buffer block bytes, vmem_limit_bytes) chosen per TPU generation."""
    try:
        info = pltpu.get_tpu_info()
        vmem_bytes = int(getattr(info, "vmem_capacity_bytes", 0))
    except Exception:  # pragma: no cover - conservative fallback off-TPU/old jax
        vmem_bytes = 0
    if vmem_bytes and vmem_bytes <= 64 * 1024 * 1024:
        # v7x: 64 MiB physical VMEM / 3.2 TB/s HBM -> bigger per-step bytes,
        # explicit scoped limit with headroom (in+out, double-buffered: 24 MiB).
        return 6 * 1024 * 1024, 40 * 1024 * 1024
    if vmem_bytes >= 128 * 1024 * 1024:
        # v5e/v6e: 128 MiB physical.  4 MiB blocks use 16 MiB scoped VMEM,
        # which is exactly v5e's default limit -> raise it explicitly.
        return 4 * 1024 * 1024, 48 * 1024 * 1024
    # Unknown generation: stay under every default scoped-VMEM limit.
    return 2 * 1024 * 1024, 32 * 1024 * 1024


def _pick_block_rows(rows_aligned, lanes, itemsize, sublane, block_bytes):
    """Largest sublane-aligned block <= byte budget, with >= 2 blocks total.

    Prefers a block count that divides rows_aligned exactly (no grid padding),
    but never shrinks the block below half the byte-budget cap just to get
    divisibility.
    """
    bytes_per_row = lanes * itemsize
    cap = max(sublane, (block_bytes // bytes_per_row) // sublane * sublane)
    # Guarantee num_blocks >= 2 so the 'parallel' grid shards over both v7x TCs.
    half = max(sublane, (rows_aligned // 2) // sublane * sublane)
    cap = min(cap, half, rows_aligned)
    r = cap
    lo = max(sublane, cap // 2)
    while r >= lo:
        if rows_aligned % r == 0:
            return r
        r -= sublane
    return cap


def _touch_input_on_tpu(x: jax.Array) -> jax.Array:
    """Optimized lane-dense pass-through kernel (demo / debug path only)."""
    orig_shape = x.shape
    dtype = x.dtype
    n = math.prod(orig_shape) if orig_shape else 1
    if n == 0:
        return x

    itemsize = jnp.dtype(dtype).itemsize
    sublane = _sublane_multiple(dtype)
    lanes = _pick_lanes(n)
    rows = pl.cdiv(n, lanes)

    # Too small to form two sublane-aligned blocks: a single-block launch is
    # pure overhead and the kernel is the identity anyway -> skip the launch.
    if rows < 2 * sublane:
        return x

    block_bytes, vmem_limit = _block_budget()
    rows_aligned = pl.cdiv(rows, sublane) * sublane
    block_rows = _pick_block_rows(rows_aligned, lanes, itemsize, sublane, block_bytes)
    num_blocks = pl.cdiv(rows_aligned, block_rows)
    padded_rows = num_blocks * block_rows
    padded_n = padded_rows * lanes

    flat = x.reshape(-1)
    if padded_n != n:
        # Single combined (lane + grid) pad; only for ragged element counts.
        flat = jnp.pad(flat, (0, padded_n - n))
    slab = flat.reshape(padded_rows, lanes)

    out = pl.pallas_call(
        _copy_kernel,
        out_shape=jax.ShapeDtypeStruct((padded_rows, lanes), dtype),
        grid=(num_blocks,),
        in_specs=[pl.BlockSpec((block_rows, lanes), lambda i: (i, 0))],
        out_specs=pl.BlockSpec((block_rows, lanes), lambda i: (i, 0)),
        compiler_params=pltpu.CompilerParams(
            dimension_semantics=("parallel",),
            vmem_limit_bytes=vmem_limit,
        ),
    )(slab)

    out_flat = out.reshape(-1)
    if padded_n != n:
        out_flat = out_flat[:n]
    return out_flat.reshape(orig_shape)


# jit so the (rare) pad/reshape plumbing fuses with the kernel launch.
_touch_input_on_tpu_jit = jax.jit(_touch_input_on_tpu)


def video_discriminator_forward(inputs: jax.Array, *, debug_touch: bool = False):
    """Exact semantic match of VideoDiscriminator.forward: returns None.

    The reference module ignores `inputs` entirely and returns None, so the
    forward path performs ZERO device work.  The optimized pass-through kernel
    is only reachable behind an explicit debug flag.
    """
    if debug_touch:
        _ = _touch_input_on_tpu_jit(inputs)
    return None


if __name__ == "__main__":
    key = jax.random.PRNGKey(0)
    k1, k2, k3 = jax.random.split(key, 3)

    # Small NCHW "video frame batch" consistent with the module's (ignored)
    # input: batch=2, channels=4, spatial=16x16.
    x = jax.random.normal(k1, (2, 4, 16, 16), dtype=jnp.float32)

    # Faithful forward pass: zero work, returns None, exactly like PyTorch.
    assert video_discriminator_forward(x) is None

    # Exercise the optimized pass-through kernel (debug path) on inputs big
    # enough to warrant a launch (>= 2 blocks), including a ragged shape that
    # needs the single combined pad and a 16-bit dtype (sublane packing = 16).
    demos = [
        jax.random.normal(k2, (2, 4, 128, 128), dtype=jnp.float32),   # no padding
        jax.random.normal(k3, (3, 5, 17, 19), dtype=jnp.float32),     # ragged -> 1 pad
        jax.random.normal(k1, (2, 4, 64, 128), dtype=jnp.bfloat16),   # bf16 sublanes
    ]
    for d in demos:
        y = _touch_input_on_tpu_jit(d)
        jax.block_until_ready(y)
        assert y.shape == d.shape and y.dtype == d.dtype
        assert bool(jnp.array_equal(d, y))

    # Tiny input: skip path (no launch), still the exact identity.
    y_small = _touch_input_on_tpu_jit(x)
    jax.block_until_ready(y_small)
    assert bool(jnp.array_equal(x, y_small))

    print("KERNEL_OK")
</pallas_src>

<mosaic_0001>
module attributes {stable_mosaic.version = 11 : i64} {
  func.func @_copy_kernel(%arg0: i32, %arg1: memref<64x1024xf32, #tpu.memory_space<vmem>>, %arg2: memref<64x1024xf32, #tpu.memory_space<vmem>>) attributes {dimension_semantics = [#tpu.dimension_semantics<parallel>], iteration_bounds = array<i64: 2>, scalar_prefetch = 0 : i64, scratch_operands = 0 : i64, tpu.core_type = #tpu.core_type<tc>, window_params = [{transform_indices = @transform_0, window_bounds = array<i64: 64, 1024>}, {transform_indices = @transform_1, window_bounds = array<i64: 64, 1024>}]} {
    %c0 = arith.constant 0 : index
    %c0_0 = arith.constant 0 : index
    %0 = vector.load %arg1[%c0, %c0_0] : memref<64x1024xf32, #tpu.memory_space<vmem>>, vector<64x1024xf32>
    %c0_1 = arith.constant 0 : index
    %c0_2 = arith.constant 0 : index
    %1 = vector.load %arg2[%c0_1, %c0_2] : memref<64x1024xf32, #tpu.memory_space<vmem>>, vector<64x1024xf32>
    tpu.vector_store %arg2[%c0_1, %c0_2], %0 {strides = array<i32>} : memref<64x1024xf32, #tpu.memory_space<vmem>>, vector<64x1024xf32>,
    return
  }
  func.func @transform_0(%arg0: i32) -> (i32, i32) {
    %c0_i32 = arith.constant 0 : i32
    %c0_i32_0 = arith.constant 0 : i32
    return %arg0, %c0_i32 : i32, i32
  }
  func.func @transform_1(%arg0: i32) -> (i32, i32) {
    %c0_i32 = arith.constant 0 : i32
    %c0_i32_0 = arith.constant 0 : i32
    return %arg0, %c0_i32 : i32, i32
  }
}

</mosaic_0001>

<llo_original>
// kernel: _touch_input_on_tpu.1
$region0: #{_touch_input_on_tpu.1}
  #allocation0 [shape = 'u32[]', space=smem, size = 0x4, offset = 0x4, fixed_abs, tag = 'smem constant byte address 0x4 - core index']
  #allocation1 [shape = 'u32[144,128]{1,0:T(1,128)}', space=vmem, size = 0x12000, scoped, tag = 'internal scratch']
  %s0 = inlined_call_operand.vmem [shape: f32[128,1024], index: 0, kind: input, shape index: {}]
  %s1 = inlined_call_operand.vmem [shape: f32[128,1024], index: 1, kind: output, shape index: {}]
  %s2 = sld [smem:[#allocation0]]
  $region37: #{_touch_input_on_tpu.1} parent=0
    _
  %s4 = ssub.s32 1, %s2
  %s5 = scalar_select 0, %s4, %s2
  loop: start=0, step=1, limit=4
  $region2: #{_touch_input_on_tpu.1} parent=0 // loop_pre_header
    _
  $region3: #{_touch_input_on_tpu.1} parent=0 // loop_header
    %s7 = sphi 0, %s11
    %p8 = scmp.ge.s32.totalorder %s7, 4
    %s17 = sphi 0, %s19
    %s20 = sphi 0, %s17
    %s21 = sphi 0, %s20
    %s37 = sphi 0, %s21
    %s43 = sphi 0, %s45
    %s46 = sphi 0, %s43
    %s47 = sphi 0, %s46
    %s63 = sphi 0, %s47
  $region4: #{_touch_input_on_tpu.1} parent=0 // loop_header_branch
    %10 = sbr.rel (%p8) target = $region8
  $region5: #{_touch_input_on_tpu.1} parent=0 // loop_body
    %s12 = ssub.s32 %s7, 1
    %s13 = ssub.s32 %s7, 2
    %s14 = sadd.s32 %s7, 1
    %s15 = ssub.s32 %s7, %s14
    %p16 = scmp.eq.s32.totalorder %s15, 0
    %s18 = sadd.s32 %s17, 1
    %s19 = scalar_select %p16, %s17, %s18
    %p22 = pneg %p16
    %p23 = scmp.eq.s32.totalorder %s7, 1
    %p24 = por %p22, %p23
    %p25 = scmp.ne.s32.totalorder %s17, %s20
    %p26 = scmp.eq.s32.totalorder %s7, 0
    %p27 = por %p25, %p26
    %p28 = scmp.ne.s32.totalorder %s17, %s20
    %p29 = scmp.eq.s32.totalorder %s12, 1
    %p30 = por %p28, %p29
    %p31 = scmp.ne.s32.totalorder %s20, %s21
    %p32 = scmp.eq.s32.totalorder %s12, 0
    %p33 = por %p31, %p32
    %p34 = scmp.ne.s32.totalorder %s20, %s21
    %p35 = scmp.eq.s32.totalorder %s13, 1
    %p36 = por %p34, %p35
    %p38 = scmp.ne.s32.totalorder %s21, %s37
    %p39 = scmp.eq.s32.totalorder %s13, 0
    %p40 = por %p38, %p39
    %s41 = ssub.s32 %s7, %s14
    %p42 = scmp.eq.s32.totalorder %s41, 0
    %s44 = sadd.s32 %s43, 1
    %s45 = scalar_select %p42, %s43, %s44
    %p48 = pneg %p42
    %p49 = scmp.eq.s32.totalorder %s7, 1
    %p50 = por %p48, %p49
    %p51 = scmp.ne.s32.totalorder %s43, %s46
    %p52 = scmp.eq.s32.totalorder %s7, 0
    %p53 = por %p51, %p52
    %p54 = scmp.ne.s32.totalorder %s43, %s46
    %p55 = scmp.eq.s32.totalorder %s12, 1
    %p56 = por %p54, %p55
    %p57 = scmp.ne.s32.totalorder %s46, %s47
    %p58 = scmp.eq.s32.totalorder %s12, 0
    %p59 = por %p57, %p58
    %p60 = scmp.ne.s32.totalorder %s46, %s47
    %p61 = scmp.eq.s32.totalorder %s13, 1
    %p62 = por %p60, %p61
    %p64 = scmp.ne.s32.totalorder %s47, %s63
    %p65 = scmp.eq.s32.totalorder %s13, 0
    %p66 = por %p64, %p65
    %p67 = scmp.le.s32.totalorder 1, %s7
    %p68 = scmp.lt.s32.totalorder %s7, 3
    %p69 = pnand %p67, %p68
    %p70 = pneg %p69
    // Predicated region
    $region9: #{_touch_input_on_tpu.1} parent=5 // pred_check
      _
    $region10: #{_touch_input_on_tpu.1} parent=5 // pred_check_branch
      %72 = sbr.rel (%p69) target = $region12
    $region11: #{_touch_input_on_tpu.1} parent=5 // pred_region
      %s73 = ssub.s32 %s7, 1
    $region12: #{_touch_input_on_tpu.1} parent=5 // pred_fallthru
      _
    %p74 = scmp.lt.s32.totalorder %s7, 2
    // Predicated region
    $region13: #{_touch_input_on_tpu.1} parent=5 // pred_check
      %p75 = pneg %p74
    $region14: #{_touch_input_on_tpu.1} parent=5 // pred_check_branch
      %77 = sbr.rel (%p75) target = $region16
    $region15: #{_touch_input_on_tpu.1} parent=5 // pred_region
      // Predicated region
      $region17: #{_touch_input_on_tpu.1} parent=15 // pred_check
        %p78 = pneg %p27
      $region18: #{_touch_input_on_tpu.1} parent=15 // pred_check_branch
        %80 = sbr.rel (%p78) target = $region20
      $region19: #{_touch_input_on_tpu.1} parent=15 // pred_region
        %s81 = smul.u32 8, %s7
        %p82 = scmp.lt.s32.totalorder %s81, 15
        %s83 = scalar_select %p82, %s81, 15
        %s84 = smul.addr %s83, 8
        %s85 = smul.addr %s84, 8
        %s86 = scalar_lea.vmem %s0, %s85
        %s87 = smul.u32 8, %s7
      $region20: #{_touch_input_on_tpu.1} parent=15 // pred_fallthru
        _
    $region16: #{_touch_input_on_tpu.1} parent=5 // pred_fallthru
      _
    %p88 = scmp.le.s32.totalorder 1, %s7
    %p89 = scmp.lt.s32.totalorder %s7, 3
    %p90 = pnand %p88, %p89
    %p91 = pneg %p90
    // Predicated region
    $region21: #{_touch_input_on_tpu.1} parent=5 // pred_check
      _
    $region22: #{_touch_input_on_tpu.1} parent=5 // pred_check_branch
      %93 = sbr.rel (%p90) target = $region24
    $region23: #{_touch_input_on_tpu.1} parent=5 // pred_region
      %s94 = ssub.s32 %s7, 1
      %s95 = smul.u32 8, %s12
      %p96 = scmp.lt.s32.totalorder %s95, 15
      %s97 = scalar_select %p96, %s95, 15
      %s98 = smul.addr %s97, 8
      %s99 = smul.addr %s98, 8
      %s100 = scalar_lea.vmem %s0, %s99
      %p101 = pneg %p33
      %p102 = pneg %p30
      %p103 = pneg %p59
      %p104 = pneg %p56
      %s105 = smul.u32 8, %s12
      %p106 = scmp.lt.s32.totalorder %s105, 15
      %s107 = scalar_select %p106, %s105, 15
      %s108 = smul.addr %s107, 8
      %s109 = smul.addr %s108, 8
      %s110 = scalar_lea.vmem %s1, %s109
      %s111 = smul.u32 8, %s12
      %p112 = scmp.lt.s32.totalorder %s111, 15
      %s113 = scalar_select %p112, %s111, 15
      %s114 = smul.addr %s113, 8
      %s115 = smul.addr %s114, 8
      %s116 = scalar_lea.vmem %s0, %s115
      %s117 = smul.u32 8, %s12
      %s118 = smul.u32 8, %s12
      %p119 = scmp.lt.s32.totalorder %s118, 15
      %s120 = scalar_select %p119, %s118, 15
      %s121 = smul.addr %s120, 8
      %s122 = smul.addr %s121, 8
      %s123 = scalar_lea.vmem %s1, %s122
      %s124 = smul.u32 8, %s12
      %v125 = vld [vmem:[%s116] sm:$0xff]
      %v126 = vld [vmem:[%s116 + $0x8] sm:$0xff]
      %v127 = vld [vmem:[%s116 + $0x10] sm:$0xff]
      %v128 = vld [vmem:[%s116 + $0x18] sm:$0xff]
      %v129 = vld [vmem:[%s116 + $0x20] sm:$0xff]
      %v130 = vld [vmem:[%s116 + $0x28] sm:$0xff]
      %v131 = vld [vmem:[%s116 + $0x30] sm:$0xff]
      %v132 = vld [vmem:[%s116 + $0x38] sm:$0xff]
      %v133 = vld [vmem:[%s116 + $0x40] sm:$0xff]
      %v134 = vld [vmem:[%s116 + $0x48] sm:$0xff]
      %v135 = vld [vmem:[%s116 + $0x50] sm:$0xff]
      %v136 = vld [vmem:[%s116 + $0x58] sm:$0xff]
      %v137 = vld [vmem:[%s116 + $0x60] sm:$0xff]
      %v138 = vld [vmem:[%s116 + $0x68] sm:$0xff]
      %v139 = vld [vmem:[%s116 + $0x70] sm:$0xff]
      %v140 = vld [vmem:[%s116 + $0x78] sm:$0xff]
      %v141 = vld [vmem:[%s116 + $0x80] sm:$0xff]
      %v142 = vld [vmem:[%s116 + $0x88] sm:$0xff]
      %v143 = vld [vmem:[%s116 + $0x90] sm:$0xff]
      %v144 = vld [vmem:[%s116 + $0x98] sm:$0xff]
      %v145 = vld [vmem:[%s116 + $0xa0] sm:$0xff]
      %v146 = vld [vmem:[%s116 + $0xa8] sm:$0xff]
      %v147 = vld [vmem:[%s116 + $0xb0] sm:$0xff]
      %v148 = vld [vmem:[%s116 + $0xb8] sm:$0xff]
      %v149 = vld [vmem:[%s116 + $0xc0] sm:$0xff]
      %v150 = vld [vmem:[%s116 + $0xc8] sm:$0xff]
      %v151 = vld [vmem:[%s116 + $0xd0] sm:$0xff]
      %v152 = vld [vmem:[%s116 + $0xd8] sm:$0xff]
      %v153 = vld [vmem:[%s116 + $0xe0] sm:$0xff]
      %v154 = vld [vmem:[%s116 + $0xe8] sm:$0xff]
      %v155 = vld [vmem:[%s116 + $0xf0] sm:$0xff]
      %v156 = vld [vmem:[%s116 + $0xf8] sm:$0xff]
      %v157 = vld [vmem:[%s116 + $0x100] sm:$0xff]
      %v158 = vld [vmem:[%s116 + $0x108] sm:$0xff]
      %v159 = vld [vmem:[%s116 + $0x110] sm:$0xff]
      %v160 = vld [vmem:[%s116 + $0x118] sm:$0xff]
      %v161 = vld [vmem:[%s116 + $0x120] sm:$0xff]
      %v162 = vld [vmem:[%s116 + $0x128] sm:$0xff]
      %v163 = vld [vmem:[%s116 + $0x130] sm:$0xff]
      %v164 = vld [vmem:[%s116 + $0x138] sm:$0xff]
      %v165 = vld [vmem:[%s116 + $0x140] sm:$0xff]
      %v166 = vld [vmem:[%s116 + $0x148] sm:$0xff]
      %v167 = vld [vmem:[%s116 + $0x150] sm:$0xff]
      %v168 = vld [vmem:[%s116 + $0x158] sm:$0xff]
      %v169 = vld [vmem:[%s116 + $0x160] sm:$0xff]
      %v170 = vld [vmem:[%s116 + $0x168] sm:$0xff]
      %v171 = vld [vmem:[%s116 + $0x170] sm:$0xff]
      %v172 = vld [vmem:[%s116 + $0x178] sm:$0xff]
      %v173 = vld [vmem:[%s116 + $0x180] sm:$0xff]
      %v174 = vld [vmem:[%s116 + $0x188] sm:$0xff]
      %v175 = vld [vmem:[%s116 + $0x190] sm:$0xff]
      %v176 = vld [vmem:[%s116 + $0x198] sm:$0xff]
      %v177 = vld [vmem:[%s116 + $0x1a0] sm:$0xff]
      %v178 = vld [vmem:[%s116 + $0x1a8] sm:$0xff]
      %v179 = vld [vmem:[%s116 + $0x1b0] sm:$0xff]
      %v180 = vld [vmem:[%s116 + $0x1b8] sm:$0xff]
      %v181 = vld [vmem:[%s116 + $0x1c0] sm:$0xff]
      %v182 = vld [vmem:[%s116 + $0x1c8] sm:$0xff]
      %v183 = vld [vmem:[%s116 + $0x1d0] sm:$0xff]
      %v184 = vld [vmem:[%s116 + $0x1d8] sm:$0xff]
      %v185 = vld [vmem:[%s116 + $0x1e0] sm:$0xff]
      %v186 = vld [vmem:[%s116 + $0x1e8] sm:$0xff]
      %v187 = vld [vmem:[%s116 + $0x1f0] sm:$0xff]
      %v188 = vld [vmem:[%s116 + $0x1f8] sm:$0xff]
      %189 = vst [vmem:[%s123] sm:$0xff] %v125
      %190 = vst [vmem:[%s123 + $0x8] sm:$0xff] %v126
      %191 = vst [vmem:[%s123 + $0x10] sm:$0xff] %v127
      %192 = vst [vmem:[%s123 + $0x18] sm:$0xff] %v128
      %193 = vst [vmem:[%s123 + $0x20] sm:$0xff] %v129
      %194 = vst [vmem:[%s123 + $0x28] sm:$0xff] %v130
      %195 = vst [vmem:[%s123 + $0x30] sm:$0xff] %v131
      %196 = vst [vmem:[%s123 + $0x38] sm:$0xff] %v132
      %197 = vst [vmem:[%s123 + $0x40] sm:$0xff] %v133
      %198 = vst [vmem:[%s123 + $0x48] sm:$0xff] %v134
      %199 = vst [vmem:[%s123 + $0x50] sm:$0xff] %v135
      %200 = vst [vmem:[%s123 + $0x58] sm:$0xff] %v136
      %201 = vst [vmem:[%s123 + $0x60] sm:$0xff] %v137
      %202 = vst [vmem:[%s123 + $0x68] sm:$0xff] %v138
      %203 = vst [vmem:[%s123 + $0x70] sm:$0xff] %v139
      %204 = vst [vmem:[%s123 + $0x78] sm:$0xff] %v140
      %205 = vst [vmem:[%s123 + $0x80] sm:$0xff] %v141
      %206 = vst [vmem:[%s123 + $0x88] sm:$0xff] %v142
      %207 = vst [vmem:[%s123 + $0x90] sm:$0xff] %v143
      %208 = vst [vmem:[%s123 + $0x98] sm:$0xff] %v144
      %209 = vst [vmem:[%s123 + $0xa0] sm:$0xff] %v145
      %210 = vst [vmem:[%s123 + $0xa8] sm:$0xff] %v146
      %211 = vst [vmem:[%s123 + $0xb0] sm:$0xff] %v147
      %212 = vst [vmem:[%s123 + $0xb8] sm:$0xff] %v148
      %213 = vst [vmem:[%s123 + $0xc0] sm:$0xff] %v149
      %214 = vst [vmem:[%s123 + $0xc8] sm:$0xff] %v150
      %215 = vst [vmem:[%s123 + $0xd0] sm:$0xff] %v151
      %216 = vst [vmem:[%s123 + $0xd8] sm:$0xff] %v152
      %217 = vst [vmem:[%s123 + $0xe0] sm:$0xff] %v153
      %218 = vst [vmem:[%s123 + $0xe8] sm:$0xff] %v154
      %219 = vst [vmem:[%s123 + $0xf0] sm:$0xff] %v155
      %220 = vst [vmem:[%s123 + $0xf8] sm:$0xff] %v156
      %221 = vst [vmem:[%s123 + $0x100] sm:$0xff] %v157
      %222 = vst [vmem:[%s123 + $0x108] sm:$0xff] %v158
      %223 = vst [vmem:[%s123 + $0x110] sm:$0xff] %v159
      %224 = vst [vmem:[%s123 + $0x118] sm:$0xff] %v160
      %225 = vst [vmem:[%s123 + $0x120] sm:$0xff] %v161
      %226 = vst [vmem:[%s123 + $0x128] sm:$0xff] %v162
      %227 = vst [vmem:[%s123 + $0x130] sm:$0xff] %v163
      %228 = vst [vmem:[%s123 + $0x138] sm:$0xff] %v164
      %229 = vst [vmem:[%s123 + $0x140] sm:$0xff] %v165
      %230 = vst [vmem:[%s123 + $0x148] sm:$0xff] %v166
      %231 = vst [vmem:[%s123 + $0x150] sm:$0xff] %v167
      %232 = vst [vmem:[%s123 + $0x158] sm:$0xff] %v168
      %233 = vst [vmem:[%s123 + $0x160] sm:$0xff] %v169
      %234 = vst [vmem:[%s123 + $0x168] sm:$0xff] %v170
      %235 = vst [vmem:[%s123 + $0x170] sm:$0xff] %v171
      %236 = vst [vmem:[%s123 + $0x178] sm:$0xff] %v172
      %237 = vst [vmem:[%s123 + $0x180] sm:$0xff] %v173
      %238 = vst [vmem:[%s123 + $0x188] sm:$0xff] %v174
      %239 = vst [vmem:[%s123 + $0x190] sm:$0xff] %v175
      %240 = vst [vmem:[%s123 + $0x198] sm:$0xff] %v176
      %241 = vst [vmem:[%s123 + $0x1a0] sm:$0xff] %v177
      %242 = vst [vmem:[%s123 + $0x1a8] sm:$0xff] %v178
      %243 = vst [vmem:[%s123 + $0x1b0] sm:$0xff] %v179
      %244 = vst [vmem:[%s123 + $0x1b8] sm:$0xff] %v180
      %245 = vst [vmem:[%s123 + $0x1c0] sm:$0xff] %v181
      %246 = vst [vmem:[%s123 + $0x1c8] sm:$0xff] %v182
      %247 = vst [vmem:[%s123 + $0x1d0] sm:$0xff] %v183
      %248 = vst [vmem:[%s123 + $0x1d8] sm:$0xff] %v184
      %249 = vst [vmem:[%s123 + $0x1e0] sm:$0xff] %v185
      %250 = vst [vmem:[%s123 + $0x1e8] sm:$0xff] %v186
      %251 = vst [vmem:[%s123 + $0x1f0] sm:$0xff] %v187
      %252 = vst [vmem:[%s123 + $0x1f8] sm:$0xff] %v188
      %s253 = smul.u32 8, %s12
      %p254 = scmp.lt.s32.totalorder %s253, 15
      %s255 = scalar_select %p254, %s253, 15
      %s256 = smul.addr %s255, 8
      %s257 = smul.addr %s256, 8
      %s258 = scalar_lea.vmem %s1, %s257
      // Predicated region
      $region25: #{_touch_input_on_tpu.1} parent=23 // pred_check
        %p259 = pneg %p56
      $region26: #{_touch_input_on_tpu.1} parent=23 // pred_check_branch
        %261 = sbr.rel (%p259) target = $region28
      $region27: #{_touch_input_on_tpu.1} parent=23 // pred_region
        %s262 = smul.u32 8, %s12
      $region28: #{_touch_input_on_tpu.1} parent=23 // pred_fallthru
        _
    $region24: #{_touch_input_on_tpu.1} parent=5 // pred_fallthru
      _
    %p263 = scmp.le.s32.totalorder 2, %s7
    // Predicated region
    $region29: #{_touch_input_on_tpu.1} parent=5 // pred_check
      %p264 = pneg %p263
    $region30: #{_touch_input_on_tpu.1} parent=5 // pred_check_branch
      %266 = sbr.rel (%p264) target = $region32
    $region31: #{_touch_input_on_tpu.1} parent=5 // pred_region
      %s267 = ssub.s32 %s7, 2
      // Predicated region
      $region33: #{_touch_input_on_tpu.1} parent=31 // pred_check
        %p268 = pneg %p62
      $region34: #{_touch_input_on_tpu.1} parent=31 // pred_check_branch
        %270 = sbr.rel (%p268) target = $region36
      $region35: #{_touch_input_on_tpu.1} parent=31 // pred_region
        %s271 = smul.u32 8, %s13
        %p272 = scmp.lt.s32.totalorder %s271, 15
        %s273 = scalar_select %p272, %s271, 15
        %s274 = smul.addr %s273, 8
        %s275 = smul.addr %s274, 8
        %s276 = scalar_lea.vmem %s1, %s275
      $region36: #{_touch_input_on_tpu.1} parent=31 // pred_fallthru
        _
    $region32: #{_touch_input_on_tpu.1} parent=5 // pred_fallthru
      _
  $region6: #{_touch_input_on_tpu.1} parent=0 // loop_footer
    %s11 = sadd.s32 1, %s7
  $region7: #{_touch_input_on_tpu.1} parent=0 // loop_footer_branch
    %6 = sbr.rel target = $region3
  $region8: #{_touch_input_on_tpu.1} parent=0 // loop_exit
    _

</llo_original>
